<compile_context>
chip_gen: v7x
topology: tpu7x:2x2x1
jax: 0.10.0
libtpu: 0.0.40
codegen_flags: <defaults>
</compile_context>

<pallas_src>
import functools

import jax
import jax.numpy as jnp
from jax.experimental import pallas as pl
from jax.experimental.pallas import tpu as pltpu


# ------------------------------ fused kernel ------------------------------

def _fused_diffuser_kernel(coef_ref, hu_ref, xw_ref, noise_ref, mask_ref,
                           w_feat_ref, b_eff_ref, w_h_ref, w_x_ref, b_eg_ref,
                           loss_ref, acc_ref, *, n_total, tile_n):
    pid = pl.program_id(0)

    @pl.when(pid == 0)
    def _init():
        acc_ref[...] = jnp.zeros_like(acc_ref)

    # Tail masking: rows past n_total in the (padded) final tile are invalid.
    row = jax.lax.broadcasted_iota(jnp.int32, (tile_n, 1), 0) + pid * tile_n
    m = mask_ref[...] * (row < n_total).astype(jnp.float32)          # [t,1]

    sqrt_ab = coef_ref[0]
    sqrt_omab = coef_ref[1]

    # scheduler.add_noise(xw, t, noise, mask)  (kept on-chip, never spilled)
    noise = noise_ref[...]                                            # [t,3]
    xw_noisy = (sqrt_ab * xw_ref[...] + sqrt_omab * noise) * m        # [t,3]

    # features_embedding with the t/T column folded into the bias.
    emb = jnp.dot(hu_ref[...], w_feat_ref[...],
                  preferred_element_type=jnp.float32) + b_eff_ref[...]  # [t,E]

    # TODO(synk): CompleteLocalFrameEGNN unavailable; single-layer stand-in
    # head consuming (hut_embedding, xw_noisy). 3x3 coord mix done on the VPU
    # (explicit broadcasts) instead of a wasteful K=3 MXU matmul.
    msg = jnp.tanh(emb)
    wx = w_x_ref[...]                                                 # [3,3]
    coord_mix = (xw_noisy[:, 0:1] * wx[0:1, :]
                 + xw_noisy[:, 1:2] * wx[1:2, :]
                 + xw_noisy[:, 2:3] * wx[2:3, :])                     # [t,3]
    pred = (jnp.dot(msg, w_h_ref[...], preferred_element_type=jnp.float32)
            + coord_mix + b_eg_ref[...])                              # [t,3]

    # masked MSE, reduction='sum':  (noise*m - pred*m) == (noise - pred)*m
    diff = (noise - pred) * m
    acc_ref[...] += jnp.sum(diff * diff)

    @pl.when(pid == pl.num_programs(0) - 1)
    def _finalize():
        loss_ref[...] = acc_ref[...]


def fused_diffuser_loss(hu, xw, noise, mask, coef,
                        w_feat, b_eff, w_h, w_x, b_eg, *, max_tile=512):
    """Single pallas_call computing the masked MSE-sum diffusion loss."""
    n, f_in = hu.shape
    e_dim = w_feat.shape[1]
    # Single grid step at small N; cap tile for large N (multiple of 8).
    tile_n = n if n <= max_tile else max_tile
    grid = (pl.cdiv(n, tile_n),)

    kernel = functools.partial(_fused_diffuser_kernel,
                               n_total=n, tile_n=tile_n)
    out = pl.pallas_call(
        kernel,
        out_shape=jax.ShapeDtypeStruct((1, 1), jnp.float32),
        grid=grid,
        in_specs=[
            pl.BlockSpec(memory_space=pltpu.MemorySpace.SMEM),    # coef (2,)
            pl.BlockSpec((tile_n, f_in), lambda i: (i, 0)),       # hu
            pl.BlockSpec((tile_n, 3), lambda i: (i, 0)),          # xw
            pl.BlockSpec((tile_n, 3), lambda i: (i, 0)),          # noise
            pl.BlockSpec((tile_n, 1), lambda i: (i, 0)),          # mask
            pl.BlockSpec((f_in, e_dim), lambda i: (0, 0)),        # W_feat
            pl.BlockSpec((1, e_dim), lambda i: (0, 0)),           # b_eff
            pl.BlockSpec((e_dim, 3), lambda i: (0, 0)),           # W_h
            pl.BlockSpec((3, 3), lambda i: (0, 0)),               # W_x
            pl.BlockSpec((1, 3), lambda i: (0, 0)),               # b_egnn
        ],
        out_specs=pl.BlockSpec((1, 1), lambda i: (0, 0)),
        scratch_shapes=[pltpu.VMEM((1, 1), jnp.float32)],         # loss acc
        compiler_params=pltpu.CompilerParams(
            dimension_semantics=("arbitrary",)),                  # reduction
    )(coef, hu, xw, noise, mask, w_feat, b_eff, w_h, w_x, b_eg)
    return out[0, 0]


# ----------------------------- Diffuser (glue) -----------------------------

class PallasBaseDiffuser:
    """JAX/Pallas port of BaseDiffuser.forward (training loss path)."""

    def __init__(self, num_timesteps, dim_features, dim_embedding, num_layers,
                 scheduler_type, key):
        self.num_timesteps = num_timesteps
        self.dim_features = dim_features
        self.dim_embedding = dim_embedding
        self.num_layers = num_layers  # TODO(synk): unused, EGNN is a stand-in.

        # --- noise schedule (alpha_bar table), mirrors Linear/Cosine schedulers
        t_ax = jnp.arange(1, num_timesteps + 1, dtype=jnp.float32)
        if scheduler_type == "linear":
            betas = jnp.linspace(1e-4, 2e-2, num_timesteps, dtype=jnp.float32)
            self.alpha_bars = jnp.cumprod(1.0 - betas)
        elif scheduler_type == "cosine":
            s = 0.008
            f = jnp.cos((t_ax / num_timesteps + s) / (1.0 + s) * jnp.pi / 2) ** 2
            f0 = jnp.cos(jnp.asarray(s / (1.0 + s) * jnp.pi / 2)) ** 2
            self.alpha_bars = f / f0
        else:
            raise ValueError(scheduler_type)

        # --- deterministic parameter init (shapes from the PyTorch module) ---
        k1, k2, k3, k4, k5 = jax.random.split(key, 5)
        fan_in = dim_features + 1
        lim1 = 1.0 / jnp.sqrt(fan_in)
        # features_embedding = Linear(dim_features + 1, dim_embedding)
        w_embed = jax.random.uniform(
            k1, (fan_in, dim_embedding), jnp.float32, -lim1, lim1)
        self.w_feat = w_embed[:dim_features, :]    # [F, E]
        self.w_t = w_embed[dim_features:, :]       # [1, E] (t/T column weight)
        self.b_embed = jax.random.uniform(
            k2, (1, dim_embedding), jnp.float32, -lim1, lim1)
        # EGNN stand-in noise head params.
        lim2 = 1.0 / jnp.sqrt(dim_embedding)
        self.w_h = jax.random.uniform(
            k3, (dim_embedding, 3), jnp.float32, -lim2, lim2)
        self.w_x = jax.random.uniform(k4, (3, 3), jnp.float32, -lim2, lim2)
        self.b_eg = jax.random.uniform(k5, (1, 3), jnp.float32, -lim2, lim2)

    def forward(self, hu, xw, e, num_h, mask, key):
        del e  # TODO(synk): edge index only consumed by the unavailable EGNN.
        k_noise, k_t = jax.random.split(key)

        # noise = randn_like(xw); t ~ U{1, ..., T}
        noise = jax.random.normal(k_noise, xw.shape, jnp.float32)
        t = jax.random.randint(k_t, (1,), 1, self.num_timesteps + 1)

        # add_noise coefficients (scalars, land in SMEM inside the kernel).
        ab_t = self.alpha_bars[t[0] - 1]
        coef = jnp.stack([jnp.sqrt(ab_t),
                          jnp.sqrt(1.0 - ab_t)]).astype(jnp.float32)

        # Fold the constant t/T feature column into the embedding bias:
        # cat([hu, t/T], -1) @ W + b  ==  hu @ W[:F] + (t/T)*W[F:] + b
        t_frac = t[0].astype(jnp.float32) / self.num_timesteps
        b_eff = self.b_embed + t_frac * self.w_t

        loss_sum = fused_diffuser_loss(
            hu, xw, noise, mask, coef,
            self.w_feat, b_eff, self.w_h, self.w_x, self.b_eg)

        # Traced scalar (no host sync / jit-friendly); caller may .item() it.
        loss_cnt = jnp.sum(num_h) * 3
        return loss_sum, loss_cnt


# ----------------------------------- main -----------------------------------

if __name__ == "__main__":
    # Small shapes consistent with the module's node-graph forward.
    N = 128              # total nodes across the batch
    DIM_FEATURES = 7     # -> Linear input dim_features + 1 = 8
    DIM_EMBEDDING = 32
    NUM_LAYERS = 2
    NUM_TIMESTEPS = 100

    root = jax.random.PRNGKey(0)
    k_param, k_hu, k_xw, k_fwd = jax.random.split(root, 4)

    diffuser = PallasBaseDiffuser(
        num_timesteps=NUM_TIMESTEPS,
        dim_features=DIM_FEATURES,
        dim_embedding=DIM_EMBEDDING,
        num_layers=NUM_LAYERS,
        scheduler_type="linear",
        key=k_param,
    )

    hu = jax.random.normal(k_hu, (N, DIM_FEATURES), jnp.float32)
    xw = jax.random.normal(k_xw, (N, 3), jnp.float32)
    e = jnp.stack([jnp.arange(N, dtype=jnp.int32),
                   jnp.roll(jnp.arange(N, dtype=jnp.int32), 1)])  # dummy edges
    mask = (jnp.arange(N) < 120).astype(jnp.float32)[:, None]     # [N, 1]
    num_h = jnp.array([60, 60], dtype=jnp.int32)                  # per-graph counts

    forward = jax.jit(diffuser.forward)
    loss_sum, loss_cnt = forward(hu, xw, e, num_h, mask, k_fwd)
    jax.block_until_ready(loss_sum)
    assert bool(jnp.isfinite(loss_sum))
    assert int(loss_cnt) == 360
    print("KERNEL_OK")
</pallas_src>

<mosaic_0001>
module attributes {stable_mosaic.version = 11 : i64} {
  func.func @_fused_diffuser_kernel(%arg0: i32, %arg1: memref<2xf32, #tpu.memory_space<smem>>, %arg2: memref<128x7xf32, #tpu.memory_space<vmem>>, %arg3: memref<128x3xf32, #tpu.memory_space<vmem>>, %arg4: memref<128x3xf32, #tpu.memory_space<vmem>>, %arg5: memref<128x1xf32, #tpu.memory_space<vmem>>, %arg6: memref<7x32xf32, #tpu.memory_space<vmem>>, %arg7: memref<1x32xf32, #tpu.memory_space<vmem>>, %arg8: memref<32x3xf32, #tpu.memory_space<vmem>>, %arg9: memref<3x3xf32, #tpu.memory_space<vmem>>, %arg10: memref<1x3xf32, #tpu.memory_space<vmem>>, %arg11: memref<1x1xf32, #tpu.memory_space<vmem>>, %arg12: memref<1x1xf32, #tpu.memory_space<vmem>>) attributes {dimension_semantics = [#tpu.dimension_semantics<arbitrary>], iteration_bounds = array<i64: 1>, scalar_prefetch = 0 : i64, scratch_operands = 1 : i64, tpu.core_type = #tpu.core_type<tc>, window_params = [{transform_indices = @transform_0, window_bounds = array<i64: 2>}, {transform_indices = @transform_1, window_bounds = array<i64: 128, 7>}, {transform_indices = @transform_2, window_bounds = array<i64: 128, 3>}, {transform_indices = @transform_3, window_bounds = array<i64: 128, 3>}, {transform_indices = @transform_4, window_bounds = array<i64: 128, 1>}, {pipeline_mode = #tpu.pipeline_mode<synchronous>, transform_indices = @transform_5, window_bounds = array<i64: 7, 32>}, {pipeline_mode = #tpu.pipeline_mode<synchronous>, transform_indices = @transform_6, window_bounds = array<i64: 1, 32>}, {pipeline_mode = #tpu.pipeline_mode<synchronous>, transform_indices = @transform_7, window_bounds = array<i64: 32, 3>}, {pipeline_mode = #tpu.pipeline_mode<synchronous>, transform_indices = @transform_8, window_bounds = array<i64: 3, 3>}, {pipeline_mode = #tpu.pipeline_mode<synchronous>, transform_indices = @transform_9, window_bounds = array<i64: 1, 3>}, {pipeline_mode = #tpu.pipeline_mode<synchronous>, transform_indices = @transform_10, window_bounds = array<i64: 1, 1>}]} {
    %c0_i32 = arith.constant 0 : i32
    %0 = arith.cmpi eq, %arg0, %c0_i32 : i32
    %1 = arith.extui %0 : i1 to i32
    %c0_i32_0 = arith.constant 0 : i32
    %2 = arith.cmpi ne, %1, %c0_i32_0 : i32
    scf.if %2 {
      %cst_28 = arith.constant 0.000000e+00 : f32
      %70 = vector.broadcast %cst_28 : f32 to vector<1x1xf32>
      %c0_29 = arith.constant 0 : index
      %c0_30 = arith.constant 0 : index
      %71 = vector.load %arg12[%c0_29, %c0_30] : memref<1x1xf32, #tpu.memory_space<vmem>>, vector<1x1xf32>
      tpu.vector_store %arg12[%c0_29, %c0_30], %70 {strides = array<i32>} : memref<1x1xf32, #tpu.memory_space<vmem>>, vector<1x1xf32>,
    } else {
    }
    %3 = tpu.iota {dimensions = array<i32: 0>} : vector<128x1xi32>
    %c128_i32 = arith.constant 128 : i32
    %4 = arith.muli %arg0, %c128_i32 : i32
    %5 = vector.broadcast %4 : i32 to vector<128x1xi32>
    %6 = arith.addi %3, %5 : vector<128x1xi32>
    %c0 = arith.constant 0 : index
    %c0_1 = arith.constant 0 : index
    %7 = vector.load %arg5[%c0, %c0_1] : memref<128x1xf32, #tpu.memory_space<vmem>>, vector<128x1xf32>
    %c128_i32_2 = arith.constant 128 : i32
    %8 = vector.broadcast %c128_i32_2 : i32 to vector<128x1xi32>
    %9 = arith.cmpi slt, %6, %8 : vector<128x1xi32>
    %10 = arith.extui %9 : vector<128x1xi1> to vector<128x1xi32>
    %11 = arith.sitofp %10 : vector<128x1xi32> to vector<128x1xf32>
    %12 = arith.mulf %7, %11 : vector<128x1xf32>
    %c0_3 = arith.constant 0 : index
    %13 = memref.load %arg1[%c0_3] : memref<2xf32, #tpu.memory_space<smem>>
    %c1 = arith.constant 1 : index
    %14 = memref.load %arg1[%c1] : memref<2xf32, #tpu.memory_space<smem>>
    %c0_4 = arith.constant 0 : index
    %c0_5 = arith.constant 0 : index
    %15 = vector.load %arg4[%c0_4, %c0_5] : memref<128x3xf32, #tpu.memory_space<vmem>>, vector<128x3xf32>
    %c0_6 = arith.constant 0 : index
    %c0_7 = arith.constant 0 : index
    %16 = vector.load %arg3[%c0_6, %c0_7] : memref<128x3xf32, #tpu.memory_space<vmem>>, vector<128x3xf32>
    %17 = vector.broadcast %13 : f32 to vector<128x3xf32>
    %18 = arith.mulf %17, %16 : vector<128x3xf32>
    %19 = vector.broadcast %14 : f32 to vector<128x3xf32>
    %20 = arith.mulf %19, %15 : vector<128x3xf32>
    %21 = arith.addf %18, %20 : vector<128x3xf32>
    %22 = vector.broadcast %12 : vector<128x1xf32> to vector<128x3xf32>
    %23 = arith.mulf %21, %22 : vector<128x3xf32>
    %c0_8 = arith.constant 0 : index
    %c0_9 = arith.constant 0 : index
    %24 = vector.load %arg2[%c0_8, %c0_9] : memref<128x7xf32, #tpu.memory_space<vmem>>, vector<128x7xf32>
    %c0_10 = arith.constant 0 : index
    %c0_11 = arith.constant 0 : index
    %25 = vector.load %arg6[%c0_10, %c0_11] : memref<7x32xf32, #tpu.memory_space<vmem>>, vector<7x32xf32>
    %cst = arith.constant dense<0.000000e+00> : vector<128x32xf32>
    %26 = tpu.matmul %24, %25, %cst {dimension_numbers = #tpu.dot_dimension_numbers<[1], [0], [0], [1], [0, 0, 1, 1], [], []>} : vector<128x7xf32>, vector<7x32xf32>, vector<128x32xf32> -> vector<128x32xf32>
    %c0_12 = arith.constant 0 : index
    %c0_13 = arith.constant 0 : index
    %27 = vector.load %arg7[%c0_12, %c0_13] : memref<1x32xf32, #tpu.memory_space<vmem>>, vector<1x32xf32>
    %28 = vector.broadcast %27 : vector<1x32xf32> to vector<128x32xf32>
    %29 = arith.addf %26, %28 : vector<128x32xf32>
    %30 = math.tanh %29 : vector<128x32xf32>
    %c0_14 = arith.constant 0 : index
    %c0_15 = arith.constant 0 : index
    %31 = vector.load %arg9[%c0_14, %c0_15] : memref<3x3xf32, #tpu.memory_space<vmem>>, vector<3x3xf32>
    %32 = vector.extract_strided_slice %23 {offsets = [0, 0], sizes = [128, 1], strides = [1, 1]} : vector<128x3xf32> to vector<128x1xf32>
    %33 = vector.extract_strided_slice %31 {offsets = [0, 0], sizes = [1, 3], strides = [1, 1]} : vector<3x3xf32> to vector<1x3xf32>
    %34 = vector.broadcast %32 : vector<128x1xf32> to vector<128x3xf32>
    %35 = vector.broadcast %33 : vector<1x3xf32> to vector<128x3xf32>
    %36 = arith.mulf %34, %35 : vector<128x3xf32>
    %37 = vector.extract_strided_slice %23 {offsets = [0, 1], sizes = [128, 1], strides = [1, 1]} : vector<128x3xf32> to vector<128x1xf32>
    %38 = vector.extract_strided_slice %31 {offsets = [1, 0], sizes = [1, 3], strides = [1, 1]} : vector<3x3xf32> to vector<1x3xf32>
    %39 = vector.broadcast %37 : vector<128x1xf32> to vector<128x3xf32>
    %40 = vector.broadcast %38 : vector<1x3xf32> to vector<128x3xf32>
    %41 = arith.mulf %39, %40 : vector<128x3xf32>
    %42 = arith.addf %36, %41 : vector<128x3xf32>
    %43 = vector.extract_strided_slice %23 {offsets = [0, 2], sizes = [128, 1], strides = [1, 1]} : vector<128x3xf32> to vector<128x1xf32>
    %44 = vector.extract_strided_slice %31 {offsets = [2, 0], sizes = [1, 3], strides = [1, 1]} : vector<3x3xf32> to vector<1x3xf32>
    %45 = vector.broadcast %43 : vector<128x1xf32> to vector<128x3xf32>
    %46 = vector.broadcast %44 : vector<1x3xf32> to vector<128x3xf32>
    %47 = arith.mulf %45, %46 : vector<128x3xf32>
    %48 = arith.addf %42, %47 : vector<128x3xf32>
    %c0_16 = arith.constant 0 : index
    %c0_17 = arith.constant 0 : index
    %49 = vector.load %arg8[%c0_16, %c0_17] : memref<32x3xf32, #tpu.memory_space<vmem>>, vector<32x3xf32>
    %cst_18 = arith.constant dense<0.000000e+00> : vector<128x3xf32>
    %50 = tpu.matmul %30, %49, %cst_18 {dimension_numbers = #tpu.dot_dimension_numbers<[1], [0], [0], [1], [0, 0, 1, 1], [], []>} : vector<128x32xf32>, vector<32x3xf32>, vector<128x3xf32> -> vector<128x3xf32>
    %51 = arith.addf %50, %48 : vector<128x3xf32>
    %c0_19 = arith.constant 0 : index
    %c0_20 = arith.constant 0 : index
    %52 = vector.load %arg10[%c0_19, %c0_20] : memref<1x3xf32, #tpu.memory_space<vmem>>, vector<1x3xf32>
    %53 = vector.broadcast %52 : vector<1x3xf32> to vector<128x3xf32>
    %54 = arith.addf %51, %53 : vector<128x3xf32>
    %55 = arith.subf %15, %54 : vector<128x3xf32>
    %56 = vector.broadcast %12 : vector<128x1xf32> to vector<128x3xf32>
    %57 = arith.mulf %55, %56 : vector<128x3xf32>
    %c0_21 = arith.constant 0 : index
    %c0_22 = arith.constant 0 : index
    %58 = vector.load %arg12[%c0_21, %c0_22] : memref<1x1xf32, #tpu.memory_space<vmem>>, vector<1x1xf32>
    %59 = arith.mulf %57, %57 : vector<128x3xf32>
    %60 = vector.shape_cast %59 : vector<128x3xf32> to vector<1x128x3xf32>
    %cst_23 = arith.constant dense<0.000000e+00> : vector<1xf32>
    %61 = vector.multi_reduction <add>, %60, %cst_23 [1, 2] : vector<1x128x3xf32> to vector<1xf32>
    %62 = vector.shape_cast %61 : vector<1xf32> to vector<1x1x1xf32>
    %63 = vector.extract %62[0, 0, 0] : f32 from vector<1x1x1xf32>
    %64 = vector.broadcast %63 : f32 to vector<1x1xf32>
    %65 = arith.addf %58, %64 : vector<1x1xf32>
    %c0_24 = arith.constant 0 : index
    %c0_25 = arith.constant 0 : index
    %66 = vector.load %arg12[%c0_24, %c0_25] : memref<1x1xf32, #tpu.memory_space<vmem>>, vector<1x1xf32>
    tpu.vector_store %arg12[%c0_24, %c0_25], %65 {strides = array<i32>} : memref<1x1xf32, #tpu.memory_space<vmem>>, vector<1x1xf32>,
    %c0_i32_26 = arith.constant 0 : i32
    %67 = arith.cmpi eq, %arg0, %c0_i32_26 : i32
    %68 = arith.extui %67 : i1 to i32
    %c0_i32_27 = arith.constant 0 : i32
    %69 = arith.cmpi ne, %68, %c0_i32_27 : i32
    scf.if %69 {
      %c0_28 = arith.constant 0 : index
      %c0_29 = arith.constant 0 : index
      %70 = vector.load %arg12[%c0_28, %c0_29] : memref<1x1xf32, #tpu.memory_space<vmem>>, vector<1x1xf32>
      %c0_30 = arith.constant 0 : index
      %c0_31 = arith.constant 0 : index
      %71 = vector.load %arg11[%c0_30, %c0_31] : memref<1x1xf32, #tpu.memory_space<vmem>>, vector<1x1xf32>
      tpu.vector_store %arg11[%c0_30, %c0_31], %70 {strides = array<i32>} : memref<1x1xf32, #tpu.memory_space<vmem>>, vector<1x1xf32>,
    } else {
    }
    return
  }
  func.func @transform_0(%arg0: i32) -> i32 {
    %c0_i32 = arith.constant 0 : i32
    %c0_i32_0 = arith.constant 0 : i32
    return %c0_i32 : i32
  }
  func.func @transform_1(%arg0: i32) -> (i32, i32) {
    %c0_i32 = arith.constant 0 : i32
    %c0_i32_0 = arith.constant 0 : i32
    return %arg0, %c0_i32 : i32, i32
  }
  func.func @transform_2(%arg0: i32) -> (i32, i32) {
    %c0_i32 = arith.constant 0 : i32
    %c0_i32_0 = arith.constant 0 : i32
    return %arg0, %c0_i32 : i32, i32
  }
  func.func @transform_3(%arg0: i32) -> (i32, i32) {
    %c0_i32 = arith.constant 0 : i32
    %c0_i32_0 = arith.constant 0 : i32
    return %arg0, %c0_i32 : i32, i32
  }
  func.func @transform_4(%arg0: i32) -> (i32, i32) {
    %c0_i32 = arith.constant 0 : i32
    %c0_i32_0 = arith.constant 0 : i32
    return %arg0, %c0_i32 : i32, i32
  }
  func.func @transform_5(%arg0: i32) -> (i32, i32) {
    %c0_i32 = arith.constant 0 : i32
    %c0_i32_0 = arith.constant 0 : i32
    %c0_i32_1 = arith.constant 0 : i32
    return %c0_i32, %c0_i32_0 : i32, i32
  }
  func.func @transform_6(%arg0: i32) -> (i32, i32) {
    %c0_i32 = arith.constant 0 : i32
    %c0_i32_0 = arith.constant 0 : i32
    %c0_i32_1 = arith.constant 0 : i32
    return %c0_i32, %c0_i32_0 : i32, i32
  }
  func.func @transform_7(%arg0: i32) -> (i32, i32) {
    %c0_i32 = arith.constant 0 : i32
    %c0_i32_0 = arith.constant 0 : i32
    %c0_i32_1 = arith.constant 0 : i32
    return %c0_i32, %c0_i32_0 : i32, i32
  }
  func.func @transform_8(%arg0: i32) -> (i32, i32) {
    %c0_i32 = arith.constant 0 : i32
    %c0_i32_0 = arith.constant 0 : i32
    %c0_i32_1 = arith.constant 0 : i32
    return %c0_i32, %c0_i32_0 : i32, i32
  }
  func.func @transform_9(%arg0: i32) -> (i32, i32) {
    %c0_i32 = arith.constant 0 : i32
    %c0_i32_0 = arith.constant 0 : i32
    %c0_i32_1 = arith.constant 0 : i32
    return %c0_i32, %c0_i32_0 : i32, i32
  }
  func.func @transform_10(%arg0: i32) -> (i32, i32) {
    %c0_i32 = arith.constant 0 : i32
    %c0_i32_0 = arith.constant 0 : i32
    %c0_i32_1 = arith.constant 0 : i32
    return %c0_i32, %c0_i32_0 : i32, i32
  }
}

</mosaic_0001>

<llo_original>
// kernel: forward.1
$region0: #{forward.1}
  #allocation0 [shape = 'u32[]', space=smem, size = 0x4, offset = 0x4, fixed_abs, tag = 'smem constant byte address 0x4 - core index']
  #allocation1 [shape = 'u32[144,128]{1,0:T(1,128)}', space=vmem, size = 0x12000, scoped, tag = 'internal scratch']
  #allocation2 [shape = 'f32[1,1]{1,0:T(1,128)}', space=vmem, size = 0x200, scoped, tag = 'scratch operand']
  %s0 = inlined_call_operand.vmem [shape: f32[2], index: 0, kind: input, shape index: {}]
  %s1 = inlined_call_operand.vmem [shape: f32[128,7], index: 1, kind: input, shape index: {}]
  %s2 = inlined_call_operand.vmem [shape: f32[128,3], index: 2, kind: input, shape index: {}]
  %s3 = inlined_call_operand.vmem [shape: f32[128,3], index: 3, kind: input, shape index: {}]
  %s4 = inlined_call_operand.vmem [shape: f32[128,1], index: 4, kind: input, shape index: {}]
  %s5 = inlined_call_operand.vmem [shape: f32[7,32], index: 5, kind: input, shape index: {}]
  %s6 = inlined_call_operand.vmem [shape: f32[1,32], index: 6, kind: input, shape index: {}]
  %s7 = inlined_call_operand.vmem [shape: f32[32,3], index: 7, kind: input, shape index: {}]
  %s8 = inlined_call_operand.vmem [shape: f32[3,3], index: 8, kind: input, shape index: {}]
  %s9 = inlined_call_operand.vmem [shape: f32[1,3], index: 9, kind: input, shape index: {}]
  %s10 = inlined_call_operand.hbm [shape: f32[1,1], index: 10, kind: output, shape index: {}]
  %s11 = sld [smem:[#allocation0]]
  $region62: #{forward.1} parent=0
    _
  %s13 = ssub.s32 1, %s11
  %s14 = scalar_select 0, %s13, %s11
  $region1: #{forward.1} parent=0
    #allocation3 [shape = 'u8[512]{0}', space=smem, size = 0x200, scoped, tag = 'input window, operand 0, single buffered']
    #allocation4 [shape = 's32[1]{0}', space=sflag, size = 0x4, scoped, tag = 'scoped memory for forward.1']
    #allocation5 [shape = 's32[1]{0}', space=sflag, size = 0x4, scoped, tag = 'scoped memory for forward.1']
    #allocation6 [shape = 'u8[512]{0}', space=vmem, size = 0x400, scoped, tag = 'output window, operand 0, single buffered']
    %15 = vsyncpa [#allocation5], 0
    %16 = vsyncpa [#allocation4], 0
    // Predicated region
    $region2: #{forward.1} parent=1 // pred_check
      _
    $region3: #{forward.1} parent=1 // pred_check_branch
      %18 = sbr.rel (0) target = $region5
    $region4: #{forward.1} parent=1 // pred_region
      %s20 = ssub.s32 16, 16
      %21 = vsyncadd [#allocation5], %s20
      %s23 = sshll.u32 %s0, 4
      %s24 = int_to_ptr.vmem [resolvable:$true] %s23
      %26 = dma.vmem_to_smem %s24, 16, [#allocation3], [#allocation5]
    $region5: #{forward.1} parent=1 // pred_fallthru
      _
    // Predicated region
    $region6: #{forward.1} parent=1 // pred_check
      _
    $region7: #{forward.1} parent=1 // pred_check_branch
      %28 = sbr.rel (0) target = $region9
    $region8: #{forward.1} parent=1 // pred_region
      _
    $region9: #{forward.1} parent=1 // pred_fallthru
      _
    // Predicated region
    $region10: #{forward.1} parent=1 // pred_check
      _
    $region11: #{forward.1} parent=1 // pred_check_branch
      %30 = sbr.rel (0) target = $region13
    $region12: #{forward.1} parent=1 // pred_region
      _
    $region13: #{forward.1} parent=1 // pred_fallthru
      _
    // Predicated region
    $region14: #{forward.1} parent=1 // pred_check
      _
    $region15: #{forward.1} parent=1 // pred_check_branch
      %32 = sbr.rel (0) target = $region17
    $region16: #{forward.1} parent=1 // pred_region
      _
    $region17: #{forward.1} parent=1 // pred_fallthru
      _
    // Predicated region
    $region18: #{forward.1} parent=1 // pred_check
      _
    $region19: #{forward.1} parent=1 // pred_check_branch
      %34 = sbr.rel (0) target = $region21
    $region20: #{forward.1} parent=1 // pred_region
      _
    $region21: #{forward.1} parent=1 // pred_fallthru
      _
    // Predicated region
    $region22: #{forward.1} parent=1 // pred_check
      _
    $region23: #{forward.1} parent=1 // pred_check_branch
      %36 = sbr.rel (0) target = $region25
    $region24: #{forward.1} parent=1 // pred_region
      _
    $region25: #{forward.1} parent=1 // pred_fallthru
      _
    // Predicated region
    $region26: #{forward.1} parent=1 // pred_check
      _
    $region27: #{forward.1} parent=1 // pred_check_branch
      %38 = sbr.rel (0) target = $region29
    $region28: #{forward.1} parent=1 // pred_region
      _
    $region29: #{forward.1} parent=1 // pred_fallthru
      _
    // Predicated region
    $region30: #{forward.1} parent=1 // pred_check
      _
    $region31: #{forward.1} parent=1 // pred_check_branch
      %40 = sbr.rel (0) target = $region33
    $region32: #{forward.1} parent=1 // pred_region
      _
    $region33: #{forward.1} parent=1 // pred_fallthru
      _
    // Predicated region
    $region34: #{forward.1} parent=1 // pred_check
      _
    $region35: #{forward.1} parent=1 // pred_check_branch
      %42 = sbr.rel (0) target = $region37
    $region36: #{forward.1} parent=1 // pred_region
      _
    $region37: #{forward.1} parent=1 // pred_fallthru
      _
    // Predicated region
    $region38: #{forward.1} parent=1 // pred_check
      _
    $region39: #{forward.1} parent=1 // pred_check_branch
      %44 = sbr.rel (0) target = $region41
    $region40: #{forward.1} parent=1 // pred_region
      _
    $region41: #{forward.1} parent=1 // pred_fallthru
      _
    // Predicated region
    $region42: #{forward.1} parent=1 // pred_check
      _
    $region43: #{forward.1} parent=1 // pred_check_branch
      %46 = sbr.rel (0) target = $region45
    $region44: #{forward.1} parent=1 // pred_region
      %47 = dma.done [#allocation5], 16
    $region45: #{forward.1} parent=1 // pred_fallthru
      _
    %48 = sfence
    %p49 = scmp.eq.s32.totalorder 0, 0
    // Predicated region
    $region46: #{forward.1} parent=1 // pred_check
      %p50 = pneg %p49
    $region47: #{forward.1} parent=1 // pred_check_branch
      %52 = sbr.rel (%p50) target = $region49
    $region48: #{forward.1} parent=1 // pred_region
      %vm53 = vcmask 0
      %54 = vst.msk [vmem:[#allocation2] sm:$0x1] %vm53, 0.0
    $region49: #{forward.1} parent=1 // pred_fallthru
      _
    %v55 = vlaneseq
    %v56 = vshrl.u32 %v55, 7
    %v57 = vadd.s32 %v56, 8
    %v58 = vadd.s32 %v56, 16
    %v59 = vadd.s32 %v56, 24
    %v60 = vadd.s32 %v56, 32
    %v61 = vadd.s32 %v56, 40
    %v62 = vadd.s32 %v56, 48
    %v63 = vadd.s32 %v56, 56
    %v64 = vadd.s32 %v56, 64
    %v65 = vadd.s32 %v56, 72
    %v66 = vadd.s32 %v56, 80
    %v67 = vadd.s32 %v56, 88
    %v68 = vadd.s32 %v56, 96
    %v69 = vadd.s32 %v56, 104
    %v70 = vadd.s32 %v56, 112
    %v71 = vadd.s32 %v56, 120
    %s72 = smul.u32 0, 128
    %v73 = vstv %s72
    %v74 = vadd.s32 %v56, %v73
    %v75 = vadd.s32 %v57, %v73
    %v76 = vadd.s32 %v58, %v73
    %v77 = vadd.s32 %v59, %v73
    %v78 = vadd.s32 %v60, %v73
    %v79 = vadd.s32 %v61, %v73
    %v80 = vadd.s32 %v62, %v73
    %v81 = vadd.s32 %v63, %v73
    %v82 = vadd.s32 %v64, %v73
    %v83 = vadd.s32 %v65, %v73
    %v84 = vadd.s32 %v66, %v73
    %v85 = vadd.s32 %v67, %v73
    %v86 = vadd.s32 %v68, %v73
    %v87 = vadd.s32 %v69, %v73
    %v88 = vadd.s32 %v70, %v73
    %v89 = vadd.s32 %v71, %v73
    %v90 = vld [vmem:[%s4] sm:$0xff]
    %v91 = vld [vmem:[%s4 + $0x8] sm:$0xff]
    %v92 = vld [vmem:[%s4 + $0x10] sm:$0xff]
    %v93 = vld [vmem:[%s4 + $0x18] sm:$0xff]
    %v94 = vld [vmem:[%s4 + $0x20] sm:$0xff]
    %v95 = vld [vmem:[%s4 + $0x28] sm:$0xff]
    %v96 = vld [vmem:[%s4 + $0x30] sm:$0xff]
    %v97 = vld [vmem:[%s4 + $0x38] sm:$0xff]
    %v98 = vld [vmem:[%s4 + $0x40] sm:$0xff]
    %v99 = vld [vmem:[%s4 + $0x48] sm:$0xff]
    %v100 = vld [vmem:[%s4 + $0x50] sm:$0xff]
    %v101 = vld [vmem:[%s4 + $0x58] sm:$0xff]
    %v102 = vld [vmem:[%s4 + $0x60] sm:$0xff]
    %v103 = vld [vmem:[%s4 + $0x68] sm:$0xff]
    %v104 = vld [vmem:[%s4 + $0x70] sm:$0xff]
    %v105 = vld [vmem:[%s4 + $0x78] sm:$0xff]
    %vm106 = vcmp.lt.s32.totalorder %v74, 128
    %vm107 = vcmp.lt.s32.totalorder %v75, 128
    %vm108 = vcmp.lt.s32.totalorder %v76, 128
    %vm109 = vcmp.lt.s32.totalorder %v77, 128
    %vm110 = vcmp.lt.s32.totalorder %v78, 128
    %vm111 = vcmp.lt.s32.totalorder %v79, 128
    %vm112 = vcmp.lt.s32.totalorder %v80, 128
    %vm113 = vcmp.lt.s32.totalorder %v81, 128
    %vm114 = vcmp.lt.s32.totalorder %v82, 128
    %vm115 = vcmp.lt.s32.totalorder %v83, 128
    %vm116 = vcmp.lt.s32.totalorder %v84, 128
    %vm117 = vcmp.lt.s32.totalorder %v85, 128
    %vm118 = vcmp.lt.s32.totalorder %v86, 128
    %vm119 = vcmp.lt.s32.totalorder %v87, 128
    %vm120 = vcmp.lt.s32.totalorder %v88, 128
    %vm121 = vcmp.lt.s32.totalorder %v89, 128
    %v122 = vsel %vm106, 1, 0
    %v123 = vsel %vm107, 1, 0
    %v124 = vsel %vm108, 1, 0
    %v125 = vsel %vm109, 1, 0
    %v126 = vsel %vm110, 1, 0
    %v127 = vsel %vm111, 1, 0
    %v128 = vsel %vm112, 1, 0
    %v129 = vsel %vm113, 1, 0
    %v130 = vsel %vm114, 1, 0
    %v131 = vsel %vm115, 1, 0
    %v132 = vsel %vm116, 1, 0
    %v133 = vsel %vm117, 1, 0
    %v134 = vsel %vm118, 1, 0
    %v135 = vsel %vm119, 1, 0
    %v136 = vsel %vm120, 1, 0
    %v137 = vsel %vm121, 1, 0
    %v138 = vcvt.s32.f32 %v122
    %v139 = vcvt.s32.f32 %v123
    %v140 = vcvt.s32.f32 %v124
    %v141 = vcvt.s32.f32 %v125
    %v142 = vcvt.s32.f32 %v126
    %v143 = vcvt.s32.f32 %v127
    %v144 = vcvt.s32.f32 %v128
    %v145 = vcvt.s32.f32 %v129
    %v146 = vcvt.s32.f32 %v130
    %v147 = vcvt.s32.f32 %v131
    %v148 = vcvt.s32.f32 %v132
    %v149 = vcvt.s32.f32 %v133
    %v150 = vcvt.s32.f32 %v134
    %v151 = vcvt.s32.f32 %v135
    %v152 = vcvt.s32.f32 %v136
    %v153 = vcvt.s32.f32 %v137
    %v154 = vmul.f32 %v90, %v138
    %v155 = vmul.f32 %v91, %v139
    %v156 = vmul.f32 %v92, %v140
    %v157 = vmul.f32 %v93, %v141
    %v158 = vmul.f32 %v94, %v142
    %v159 = vmul.f32 %v95, %v143
    %v160 = vmul.f32 %v96, %v144
    %v161 = vmul.f32 %v97, %v145
    %v162 = vmul.f32 %v98, %v146
    %v163 = vmul.f32 %v99, %v147
    %v164 = vmul.f32 %v100, %v148
    %v165 = vmul.f32 %v101, %v149
    %v166 = vmul.f32 %v102, %v150
    %v167 = vmul.f32 %v103, %v151
    %v168 = vmul.f32 %v104, %v152
    %v169 = vmul.f32 %v105, %v153
    %s170 = sld [smem:[#allocation3]]
    %s171 = sld [smem:[#allocation3 + $0x1]]
    %v172 = vld [vmem:[%s3] sm:$0xff]
    %v173 = vld [vmem:[%s3 + $0x8] sm:$0xff]
    %v174 = vld [vmem:[%s3 + $0x10] sm:$0xff]
    %v175 = vld [vmem:[%s3 + $0x18] sm:$0xff]
    %v176 = vld [vmem:[%s3 + $0x20] sm:$0xff]
    %v177 = vld [vmem:[%s3 + $0x28] sm:$0xff]
    %v178 = vld [vmem:[%s3 + $0x30] sm:$0xff]
    %v179 = vld [vmem:[%s3 + $0x38] sm:$0xff]
    %v180 = vld [vmem:[%s3 + $0x40] sm:$0xff]
    %v181 = vld [vmem:[%s3 + $0x48] sm:$0xff]
    %v182 = vld [vmem:[%s3 + $0x50] sm:$0xff]
    %v183 = vld [vmem:[%s3 + $0x58] sm:$0xff]
    %v184 = vld [vmem:[%s3 + $0x60] sm:$0xff]
    %v185 = vld [vmem:[%s3 + $0x68] sm:$0xff]
    %v186 = vld [vmem:[%s3 + $0x70] sm:$0xff]
    %v187 = vld [vmem:[%s3 + $0x78] sm:$0xff]
    %v188 = vld [vmem:[%s2] sm:$0xff]
    %v189 = vld [vmem:[%s2 + $0x8] sm:$0xff]
    %v190 = vld [vmem:[%s2 + $0x10] sm:$0xff]
    %v191 = vld [vmem:[%s2 + $0x18] sm:$0xff]
    %v192 = vld [vmem:[%s2 + $0x20] sm:$0xff]
    %v193 = vld [vmem:[%s2 + $0x28] sm:$0xff]
    %v194 = vld [vmem:[%s2 + $0x30] sm:$0xff]
    %v195 = vld [vmem:[%s2 + $0x38] sm:$0xff]
    %v196 = vld [vmem:[%s2 + $0x40] sm:$0xff]
    %v197 = vld [vmem:[%s2 + $0x48] sm:$0xff]
    %v198 = vld [vmem:[%s2 + $0x50] sm:$0xff]
    %v199 = vld [vmem:[%s2 + $0x58] sm:$0xff]
    %v200 = vld [vmem:[%s2 + $0x60] sm:$0xff]
    %v201 = vld [vmem:[%s2 + $0x68] sm:$0xff]
    %v202 = vld [vmem:[%s2 + $0x70] sm:$0xff]
    %v203 = vld [vmem:[%s2 + $0x78] sm:$0xff]
    %v204 = vstv %s170
    %v205 = vmul.f32 %v204, %v188
    %v206 = vmul.f32 %v204, %v189
    %v207 = vmul.f32 %v204, %v190
    %v208 = vmul.f32 %v204, %v191
    %v209 = vmul.f32 %v204, %v192
    %v210 = vmul.f32 %v204, %v193
    %v211 = vmul.f32 %v204, %v194
    %v212 = vmul.f32 %v204, %v195
    %v213 = vmul.f32 %v204, %v196
    %v214 = vmul.f32 %v204, %v197
    %v215 = vmul.f32 %v204, %v198
    %v216 = vmul.f32 %v204, %v199
    %v217 = vmul.f32 %v204, %v200
    %v218 = vmul.f32 %v204, %v201
    %v219 = vmul.f32 %v204, %v202
    %v220 = vmul.f32 %v204, %v203
    %v221 = vstv %s171
    %v222 = vmul.f32 %v221, %v172
    %v223 = vmul.f32 %v221, %v173
    %v224 = vmul.f32 %v221, %v174
    %v225 = vmul.f32 %v221, %v175
    %v226 = vmul.f32 %v221, %v176
    %v227 = vmul.f32 %v221, %v177
    %v228 = vmul.f32 %v221, %v178
    %v229 = vmul.f32 %v221, %v179
    %v230 = vmul.f32 %v221, %v180
    %v231 = vmul.f32 %v221, %v181
    %v232 = vmul.f32 %v221, %v182
    %v233 = vmul.f32 %v221, %v183
    %v234 = vmul.f32 %v221, %v184
    %v235 = vmul.f32 %v221, %v185
    %v236 = vmul.f32 %v221, %v186
    %v237 = vmul.f32 %v221, %v187
    %v238 = vadd.f32 %v205, %v222
    %v239 = vadd.f32 %v206, %v223
    %v240 = vadd.f32 %v207, %v224
    %v241 = vadd.f32 %v208, %v225
    %v242 = vadd.f32 %v209, %v226
    %v243 = vadd.f32 %v210, %v227
    %v244 = vadd.f32 %v211, %v228
    %v245 = vadd.f32 %v212, %v229
    %v246 = vadd.f32 %v213, %v230
    %v247 = vadd.f32 %v214, %v231
    %v248 = vadd.f32 %v215, %v232
    %v249 = vadd.f32 %v216, %v233
    %v250 = vadd.f32 %v217, %v234
    %v251 = vadd.f32 %v218, %v235
    %v252 = vadd.f32 %v219, %v236
    %v253 = vadd.f32 %v220, %v237
    %255 = vset.pattern.permute.xlu0 0
    %256 = vperm.xlu0 %255, %v154
    %v257 = vpop.permute.xlu0 %256
    %260 = vset.pattern.permute.xlu0 0
    %261 = vperm.xlu0 %260, %v155
    %v262 = vpop.permute.xlu0 %261
    %265 = vset.pattern.permute.xlu0 0
    %266 = vperm.xlu0 %265, %v156
    %v267 = vpop.permute.xlu0 %266
    %270 = vset.pattern.permute.xlu0 0
    %271 = vperm.xlu0 %270, %v157
    %v272 = vpop.permute.xlu0 %271
    %275 = vset.pattern.permute.xlu0 0
    %276 = vperm.xlu0 %275, %v158
    %v277 = vpop.permute.xlu0 %276
    %280 = vset.pattern.permute.xlu0 0
    %281 = vperm.xlu0 %280, %v159
    %v282 = vpop.permute.xlu0 %281
    %285 = vset.pattern.permute.xlu0 0
    %286 = vperm.xlu0 %285, %v160
    %v287 = vpop.permute.xlu0 %286
    %290 = vset.pattern.permute.xlu0 0
    %291 = vperm.xlu0 %290, %v161
    %v292 = vpop.permute.xlu0 %291
    %295 = vset.pattern.permute.xlu0 0
    %296 = vperm.xlu0 %295, %v162
    %v297 = vpop.permute.xlu0 %296
    %300 = vset.pattern.permute.xlu0 0
    %301 = vperm.xlu0 %300, %v163
    %v302 = vpop.permute.xlu0 %301
    %305 = vset.pattern.permute.xlu0 0
    %306 = vperm.xlu0 %305, %v164
    %v307 = vpop.permute.xlu0 %306
    %310 = vset.pattern.permute.xlu0 0
    %311 = vperm.xlu0 %310, %v165
    %v312 = vpop.permute.xlu0 %311
    %315 = vset.pattern.permute.xlu0 0
    %316 = vperm.xlu0 %315, %v166
    %v317 = vpop.permute.xlu0 %316
    %320 = vset.pattern.permute.xlu0 0
    %321 = vperm.xlu0 %320, %v167
    %v322 = vpop.permute.xlu0 %321
    %325 = vset.pattern.permute.xlu0 0
    %326 = vperm.xlu0 %325, %v168
    %v327 = vpop.permute.xlu0 %326
    %330 = vset.pattern.permute.xlu0 0
    %331 = vperm.xlu0 %330, %v169
    %v332 = vpop.permute.xlu0 %331
    %v334 = vmul.f32 %v238, %v257
    %v335 = vmul.f32 %v239, %v262
    %v336 = vmul.f32 %v240, %v267
    %v337 = vmul.f32 %v241, %v272
    %v338 = vmul.f32 %v242, %v277
    %v339 = vmul.f32 %v243, %v282
    %v340 = vmul.f32 %v244, %v287
    %v341 = vmul.f32 %v245, %v292
    %v342 = vmul.f32 %v246, %v297
    %v343 = vmul.f32 %v247, %v302
    %v344 = vmul.f32 %v248, %v307
    %v345 = vmul.f32 %v249, %v312
    %v346 = vmul.f32 %v250, %v317
    %v347 = vmul.f32 %v251, %v322
    %v348 = vmul.f32 %v252, %v327
    %v349 = vmul.f32 %v253, %v332
    %v350 = vld [vmem:[%s1] sm:$0xff]
    %v351 = vld [vmem:[%s1 + $0x8] sm:$0xff]
    %v352 = vld [vmem:[%s1 + $0x10] sm:$0xff]
    %v353 = vld [vmem:[%s1 + $0x18] sm:$0xff]
    %v354 = vld [vmem:[%s1 + $0x20] sm:$0xff]
    %v355 = vld [vmem:[%s1 + $0x28] sm:$0xff]
    %v356 = vld [vmem:[%s1 + $0x30] sm:$0xff]
    %v357 = vld [vmem:[%s1 + $0x38] sm:$0xff]
    %v358 = vld [vmem:[%s1 + $0x40] sm:$0xff]
    %v359 = vld [vmem:[%s1 + $0x48] sm:$0xff]
    %v360 = vld [vmem:[%s1 + $0x50] sm:$0xff]
    %v361 = vld [vmem:[%s1 + $0x58] sm:$0xff]
    %v362 = vld [vmem:[%s1 + $0x60] sm:$0xff]
    %v363 = vld [vmem:[%s1 + $0x68] sm:$0xff]
    %v364 = vld [vmem:[%s1 + $0x70] sm:$0xff]
    %v365 = vld [vmem:[%s1 + $0x78] sm:$0xff]
    %v366 = vld [vmem:[%s5] sm:$0x7f]
    %v367 = vld [vmem:[%s6] sm:$0x1]
    %v369 = vlaneseq
    %v370 = vshrl.u32 %v369, 7
    %v371 = vsub.s32 0, %v370
    %v372 = vrot.slane %v367, %v371
    %vm374 = vcmask 56320
    %v376 = vsel %vm374, %v350, 0
    %v379 = vsel %vm374, %v351, 0
    %v382 = vsel %vm374, %v352, 0
    %v385 = vsel %vm374, %v353, 0
    %v388 = vsel %vm374, %v354, 0
    %v391 = vsel %vm374, %v355, 0
    %v394 = vsel %vm374, %v356, 0
    %v397 = vsel %vm374, %v357, 0
    %v400 = vsel %vm374, %v358, 0
    %v403 = vsel %vm374, %v359, 0
    %v406 = vsel %vm374, %v360, 0
    %v409 = vsel %vm374, %v361, 0
    %v412 = vsel %vm374, %v362, 0
    %v415 = vsel %vm374, %v363, 0
    %v418 = vsel %vm374, %v364, 0
    %v421 = vsel %vm374, %v365, 0
    %vm423 = vcmask 1046528
    %v425 = vsel %vm423, %v366, 0
    %427 = vmatprep.subr.mxu0 0.0
    %428 = vmatpush1.msra.mxu0 %v425
    %429 = vmatprep.subr.mxu0 0.0
    %430 = vmatpush1.msra.mxu0 0.0
    %431 = vmatprep.subr.mxu0 0.0
    %432 = vmatpush1.msra.mxu0 0.0
    %433 = vmatprep.subr.mxu0 0.0
    %434 = vmatpush1.msra.mxu0 0.0
    %435 = vmatprep.subr.mxu0 0.0
    %436 = vmatpush1.msra.mxu0 0.0
    %437 = vmatprep.subr.mxu0 0.0
    %438 = vmatpush1.msra.mxu0 0.0
    %439 = vmatprep.subr.mxu0 0.0
    %440 = vmatpush1.msra.mxu0 0.0
    %441 = vmatprep.subr.mxu0 0.0
    %442 = vmatpush1.msra.mxu0 0.0
    %443 = vmatprep.subr.mxu0 0.0
    %444 = vmatpush1.msra.mxu0 0.0
    %445 = vmatprep.subr.mxu0 0.0
    %446 = vmatpush1.msra.mxu0 0.0
    %447 = vmatprep.subr.mxu0 0.0
    %448 = vmatpush1.msra.mxu0 0.0
    %449 = vmatprep.subr.mxu0 0.0
    %450 = vmatpush1.msra.mxu0 0.0
    %451 = vmatprep.subr.mxu0 0.0
    %452 = vmatpush1.msra.mxu0 0.0
    %453 = vmatprep.subr.mxu0 0.0
    %454 = vmatpush1.msra.mxu0 0.0
    %455 = vmatprep.subr.mxu0 0.0
    %456 = vmatpush1.msra.mxu0 0.0
    %457 = vmatprep.subr.mxu0 0.0
    %458 = vmatpush1.msra.mxu0 0.0
    %459 = vmatprep.subr.mxu0 0.0
    %460 = vmatpush1.msra.mxu0 0.0
    %461 = vmatprep.subr.mxu0 0.0
    %462 = vmatpush1.msra.mxu0 0.0
    %463 = vmatprep.subr.mxu0 0.0
    %464 = vmatpush1.msra.mxu0 0.0
    %465 = vmatprep.subr.mxu0 0.0
    %466 = vmatpush1.msra.mxu0 0.0
    %467 = vmatprep.subr.mxu0 0.0
    %468 = vmatpush1.msra.mxu0 0.0
    %469 = vmatprep.subr.mxu0 0.0
    %470 = vmatpush1.msra.mxu0 0.0
    %471 = vmatprep.subr.mxu0 0.0
    %472 = vmatpush1.msra.mxu0 0.0
    %473 = vmatprep.subr.mxu0 0.0
    %474 = vmatpush1.msra.mxu0 0.0
    %475 = vmatprep.subr.mxu0 0.0
    %476 = vmatpush1.msra.mxu0 0.0
    %477 = vmatprep.subr.mxu0 0.0
    %478 = vmatpush1.msra.mxu0 0.0
    %479 = vmatprep.subr.mxu0 0.0
    %480 = vmatpush1.msra.mxu0 0.0
    %481 = vmatprep.subr.mxu0 0.0
    %482 = vmatpush1.msra.mxu0 0.0
    %483 = vmatprep.subr.mxu0 0.0
    %484 = vmatpush1.msra.mxu0 0.0
    %485 = vmatprep.subr.mxu0 0.0
    %486 = vmatpush1.msra.mxu0 0.0
    %487 = vmatprep.subr.mxu0 0.0
    %488 = vmatpush1.msra.mxu0 0.0
    %489 = vmatprep.subr.mxu0 0.0
    %490 = vmatpush1.msra.mxu0 0.0
    %491 = vmatprep.mubr.f32.mxu0 0.0
    %492 = vmatmul.mubr.f32.gmra.mrb[0].mxu0 %v376
    %v493 = vpop.f32.mrb[0].mxu0
    %v494 = vadd.f32 %v372, %v493
    %v495 = vpop.f32.mrb[0].mxu0
    %496 = vmatprep.mubr.f32.mxu0 0.0
    %497 = vmatmul.mubr.f32.gmra.mrb[0].mxu0 %v379
    %v498 = vpop.f32.mrb[0].mxu0
    %v499 = vadd.f32 %v372, %v498
    %v500 = vpop.f32.mrb[0].mxu0
    %501 = vmatprep.mubr.f32.mxu0 0.0
    %502 = vmatmul.mubr.f32.gmra.mrb[0].mxu0 %v382
    %v503 = vpop.f32.mrb[0].mxu0
    %v504 = vadd.f32 %v372, %v503
    %v505 = vpop.f32.mrb[0].mxu0
    %506 = vmatprep.mubr.f32.mxu0 0.0
    %507 = vmatmul.mubr.f32.gmra.mrb[0].mxu0 %v385
    %v508 = vpop.f32.mrb[0].mxu0
    %v509 = vadd.f32 %v372, %v508
    %v510 = vpop.f32.mrb[0].mxu0
    %511 = vmatprep.mubr.f32.mxu0 0.0
    %512 = vmatmul.mubr.f32.gmra.mrb[0].mxu0 %v388
    %v513 = vpop.f32.mrb[0].mxu0
    %v514 = vadd.f32 %v372, %v513
    %v515 = vpop.f32.mrb[0].mxu0
    %516 = vmatprep.mubr.f32.mxu0 0.0
    %517 = vmatmul.mubr.f32.gmra.mrb[0].mxu0 %v391
    %v518 = vpop.f32.mrb[0].mxu0
    %v519 = vadd.f32 %v372, %v518
    %v520 = vpop.f32.mrb[0].mxu0
    %521 = vmatprep.mubr.f32.mxu0 0.0
    %522 = vmatmul.mubr.f32.gmra.mrb[0].mxu0 %v394
    %v523 = vpop.f32.mrb[0].mxu0
    %v524 = vadd.f32 %v372, %v523
    %v525 = vpop.f32.mrb[0].mxu0
    %526 = vmatprep.mubr.f32.mxu0 0.0
    %527 = vmatmul.mubr.f32.gmra.mrb[0].mxu0 %v397
    %v528 = vpop.f32.mrb[0].mxu0
    %v529 = vadd.f32 %v372, %v528
    %v530 = vpop.f32.mrb[0].mxu0
    %531 = vmatprep.mubr.f32.mxu0 0.0
    %532 = vmatmul.mubr.f32.gmra.mrb[0].mxu0 %v400
    %v533 = vpop.f32.mrb[0].mxu0
    %v534 = vadd.f32 %v372, %v533
    %v535 = vpop.f32.mrb[0].mxu0
    %536 = vmatprep.mubr.f32.mxu0 0.0
    %537 = vmatmul.mubr.f32.gmra.mrb[0].mxu0 %v403
    %v538 = vpop.f32.mrb[0].mxu0
    %v539 = vadd.f32 %v372, %v538
    %v540 = vpop.f32.mrb[0].mxu0
    %541 = vmatprep.mubr.f32.mxu0 0.0
    %542 = vmatmul.mubr.f32.gmra.mrb[0].mxu0 %v406
    %v543 = vpop.f32.mrb[0].mxu0
    %v544 = vadd.f32 %v372, %v543
    %v545 = vpop.f32.mrb[0].mxu0
    %546 = vmatprep.mubr.f32.mxu0 0.0
    %547 = vmatmul.mubr.f32.gmra.mrb[0].mxu0 %v409
    %v548 = vpop.f32.mrb[0].mxu0
    %v549 = vadd.f32 %v372, %v548
    %v550 = vpop.f32.mrb[0].mxu0
    %551 = vmatprep.mubr.f32.mxu0 0.0
    %552 = vmatmul.mubr.f32.gmra.mrb[0].mxu0 %v412
    %v553 = vpop.f32.mrb[0].mxu0
    %v554 = vadd.f32 %v372, %v553
    %v555 = vpop.f32.mrb[0].mxu0
    %556 = vmatprep.mubr.f32.mxu0 0.0
    %557 = vmatmul.mubr.f32.gmra.mrb[0].mxu0 %v415
    %v558 = vpop.f32.mrb[0].mxu0
    %v559 = vadd.f32 %v372, %v558
    %v560 = vpop.f32.mrb[0].mxu0
    %561 = vmatprep.mubr.f32.mxu0 0.0
    %562 = vmatmul.mubr.f32.gmra.mrb[0].mxu0 %v418
    %v563 = vpop.f32.mrb[0].mxu0
    %v564 = vadd.f32 %v372, %v563
    %v565 = vpop.f32.mrb[0].mxu0
    %566 = vmatprep.mubr.f32.mxu0 0.0
    %567 = vmatmul.mubr.f32.gmra.mrb[0].mxu0 %v421
    %v568 = vpop.f32.mrb[0].mxu0
    %v569 = vadd.f32 %v372, %v568
    %v570 = vpop.f32.mrb[0].mxu0
    %571 = vdwg.mxu0
    %v572 = vtanh.pop %v494
    %v573 = vtanh.pop %v499
    %v574 = vtanh.pop %v504
    %v575 = vtanh.pop %v509
    %v576 = vtanh.pop %v514
    %v577 = vtanh.pop %v519
    %v578 = vtanh.pop %v524
    %v579 = vtanh.pop %v529
    %v580 = vtanh.pop %v534
    %v581 = vtanh.pop %v539
    %v582 = vtanh.pop %v544
    %v583 = vtanh.pop %v549
    %v584 = vtanh.pop %v554
    %v585 = vtanh.pop %v559
    %v586 = vtanh.pop %v564
    %v587 = vtanh.pop %v569
    %v588 = vld [vmem:[%s8] sm:$0x7]
    %590 = vset.pattern.permute.xlu0 0
    %591 = vperm.xlu0 %590, %v334
    %v592 = vpop.permute.xlu0 %591
    %595 = vset.pattern.permute.xlu0 0
    %596 = vperm.xlu0 %595, %v335
    %v597 = vpop.permute.xlu0 %596
    %600 = vset.pattern.permute.xlu0 0
    %601 = vperm.xlu0 %600, %v336
    %v602 = vpop.permute.xlu0 %601
    %605 = vset.pattern.permute.xlu0 0
    %606 = vperm.xlu0 %605, %v337
    %v607 = vpop.permute.xlu0 %606
    %610 = vset.pattern.permute.xlu0 0
    %611 = vperm.xlu0 %610, %v338
    %v612 = vpop.permute.xlu0 %611
    %615 = vset.pattern.permute.xlu0 0
    %616 = vperm.xlu0 %615, %v339
    %v617 = vpop.permute.xlu0 %616
    %620 = vset.pattern.permute.xlu0 0
    %621 = vperm.xlu0 %620, %v340
    %v622 = vpop.permute.xlu0 %621
    %625 = vset.pattern.permute.xlu0 0
    %626 = vperm.xlu0 %625, %v341
    %v627 = vpop.permute.xlu0 %626
    %630 = vset.pattern.permute.xlu0 0
    %631 = vperm.xlu0 %630, %v342
    %v632 = vpop.permute.xlu0 %631
    %635 = vset.pattern.permute.xlu0 0
    %636 = vperm.xlu0 %635, %v343
    %v637 = vpop.permute.xlu0 %636
    %640 = vset.pattern.permute.xlu0 0
    %641 = vperm.xlu0 %640, %v344
    %v642 = vpop.permute.xlu0 %641
    %645 = vset.pattern.permute.xlu0 0
    %646 = vperm.xlu0 %645, %v345
    %v647 = vpop.permute.xlu0 %646
    %650 = vset.pattern.permute.xlu0 0
    %651 = vperm.xlu0 %650, %v346
    %v652 = vpop.permute.xlu0 %651
    %655 = vset.pattern.permute.xlu0 0
    %656 = vperm.xlu0 %655, %v347
    %v657 = vpop.permute.xlu0 %656
    %660 = vset.pattern.permute.xlu0 0
    %661 = vperm.xlu0 %660, %v348
    %v662 = vpop.permute.xlu0 %661
    %665 = vset.pattern.permute.xlu0 0
    %666 = vperm.xlu0 %665, %v349
    %v667 = vpop.permute.xlu0 %666
    %v669 = vlaneseq
    %v670 = vshrl.u32 %v669, 7
    %v671 = vsub.s32 0, %v670
    %v672 = vrot.slane %v588, %v671
    %v673 = vmul.f32 %v592, %v672
    %v674 = vmul.f32 %v597, %v672
    %v675 = vmul.f32 %v602, %v672
    %v676 = vmul.f32 %v607, %v672
    %v677 = vmul.f32 %v612, %v672
    %v678 = vmul.f32 %v617, %v672
    %v679 = vmul.f32 %v622, %v672
    %v680 = vmul.f32 %v627, %v672
    %v681 = vmul.f32 %v632, %v672
    %v682 = vmul.f32 %v637, %v672
    %v683 = vmul.f32 %v642, %v672
    %v684 = vmul.f32 %v647, %v672
    %v685 = vmul.f32 %v652, %v672
    %v686 = vmul.f32 %v657, %v672
    %v687 = vmul.f32 %v662, %v672
    %v688 = vmul.f32 %v667, %v672
    %689 = vset.pattern.permute.xlu0 1
    %690 = vperm.xlu0 %689, %v334
    %v691 = vpop.permute.xlu0 %690
    %693 = vset.pattern.permute.xlu0 1
    %694 = vperm.xlu0 %693, %v335
    %v695 = vpop.permute.xlu0 %694
    %697 = vset.pattern.permute.xlu0 1
    %698 = vperm.xlu0 %697, %v336
    %v699 = vpop.permute.xlu0 %698
    %701 = vset.pattern.permute.xlu0 1
    %702 = vperm.xlu0 %701, %v337
    %v703 = vpop.permute.xlu0 %702
    %705 = vset.pattern.permute.xlu0 1
    %706 = vperm.xlu0 %705, %v338
    %v707 = vpop.permute.xlu0 %706
    %709 = vset.pattern.permute.xlu0 1
    %710 = vperm.xlu0 %709, %v339
    %v711 = vpop.permute.xlu0 %710
    %713 = vset.pattern.permute.xlu0 1
    %714 = vperm.xlu0 %713, %v340
    %v715 = vpop.permute.xlu0 %714
    %717 = vset.pattern.permute.xlu0 1
    %718 = vperm.xlu0 %717, %v341
    %v719 = vpop.permute.xlu0 %718
    %721 = vset.pattern.permute.xlu0 1
    %722 = vperm.xlu0 %721, %v342
    %v723 = vpop.permute.xlu0 %722
    %725 = vset.pattern.permute.xlu0 1
    %726 = vperm.xlu0 %725, %v343
    %v727 = vpop.permute.xlu0 %726
    %729 = vset.pattern.permute.xlu0 1
    %730 = vperm.xlu0 %729, %v344
    %v731 = vpop.permute.xlu0 %730
    %733 = vset.pattern.permute.xlu0 1
    %734 = vperm.xlu0 %733, %v345
    %v735 = vpop.permute.xlu0 %734
    %737 = vset.pattern.permute.xlu0 1
    %738 = vperm.xlu0 %737, %v346
    %v739 = vpop.permute.xlu0 %738
    %741 = vset.pattern.permute.xlu0 1
    %742 = vperm.xlu0 %741, %v347
    %v743 = vpop.permute.xlu0 %742
    %745 = vset.pattern.permute.xlu0 1
    %746 = vperm.xlu0 %745, %v348
    %v747 = vpop.permute.xlu0 %746
    %749 = vset.pattern.permute.xlu0 1
    %750 = vperm.xlu0 %749, %v349
    %v751 = vpop.permute.xlu0 %750
    %v753 = vlaneseq
    %v754 = vshrl.u32 %v753, 7
    %v755 = vsub.s32 1, %v754
    %v756 = vrot.slane %v588, %v755
    %v757 = vmul.f32 %v691, %v756
    %v758 = vmul.f32 %v695, %v756
    %v759 = vmul.f32 %v699, %v756
    %v760 = vmul.f32 %v703, %v756
    %v761 = vmul.f32 %v707, %v756
    %v762 = vmul.f32 %v711, %v756
    %v763 = vmul.f32 %v715, %v756
    %v764 = vmul.f32 %v719, %v756
    %v765 = vmul.f32 %v723, %v756
    %v766 = vmul.f32 %v727, %v756
    %v767 = vmul.f32 %v731, %v756
    %v768 = vmul.f32 %v735, %v756
    %v769 = vmul.f32 %v739, %v756
    %v770 = vmul.f32 %v743, %v756
    %v771 = vmul.f32 %v747, %v756
    %v772 = vmul.f32 %v751, %v756
    %v773 = vadd.f32 %v673, %v757
    %v774 = vadd.f32 %v674, %v758
    %v775 = vadd.f32 %v675, %v759
    %v776 = vadd.f32 %v676, %v760
    %v777 = vadd.f32 %v677, %v761
    %v778 = vadd.f32 %v678, %v762
    %v779 = vadd.f32 %v679, %v763
    %v780 = vadd.f32 %v680, %v764
    %v781 = vadd.f32 %v681, %v765
    %v782 = vadd.f32 %v682, %v766
    %v783 = vadd.f32 %v683, %v767
    %v784 = vadd.f32 %v684, %v768
    %v785 = vadd.f32 %v685, %v769
    %v786 = vadd.f32 %v686, %v770
    %v787 = vadd.f32 %v687, %v771
    %v788 = vadd.f32 %v688, %v772
    %789 = vset.pattern.permute.xlu0 2
    %790 = vperm.xlu0 %789, %v334
    %v791 = vpop.permute.xlu0 %790
    %793 = vset.pattern.permute.xlu0 2
    %794 = vperm.xlu0 %793, %v335
    %v795 = vpop.permute.xlu0 %794
    %797 = vset.pattern.permute.xlu0 2
    %798 = vperm.xlu0 %797, %v336
    %v799 = vpop.permute.xlu0 %798
    %801 = vset.pattern.permute.xlu0 2
    %802 = vperm.xlu0 %801, %v337
    %v803 = vpop.permute.xlu0 %802
    %805 = vset.pattern.permute.xlu0 2
    %806 = vperm.xlu0 %805, %v338
    %v807 = vpop.permute.xlu0 %806
    %809 = vset.pattern.permute.xlu0 2
    %810 = vperm.xlu0 %809, %v339
    %v811 = vpop.permute.xlu0 %810
    %813 = vset.pattern.permute.xlu0 2
    %814 = vperm.xlu0 %813, %v340
    %v815 = vpop.permute.xlu0 %814
    %817 = vset.pattern.permute.xlu0 2
    %818 = vperm.xlu0 %817, %v341
    %v819 = vpop.permute.xlu0 %818
    %821 = vset.pattern.permute.xlu0 2
    %822 = vperm.xlu0 %821, %v342
    %v823 = vpop.permute.xlu0 %822
    %825 = vset.pattern.permute.xlu0 2
    %826 = vperm.xlu0 %825, %v343
    %v827 = vpop.permute.xlu0 %826
    %829 = vset.pattern.permute.xlu0 2
    %830 = vperm.xlu0 %829, %v344
    %v831 = vpop.permute.xlu0 %830
    %833 = vset.pattern.permute.xlu0 2
    %834 = vperm.xlu0 %833, %v345
    %v835 = vpop.permute.xlu0 %834
    %837 = vset.pattern.permute.xlu0 2
    %838 = vperm.xlu0 %837, %v346
    %v839 = vpop.permute.xlu0 %838
    %841 = vset.pattern.permute.xlu0 2
    %842 = vperm.xlu0 %841, %v347
    %v843 = vpop.permute.xlu0 %842
    %845 = vset.pattern.permute.xlu0 2
    %846 = vperm.xlu0 %845, %v348
    %v847 = vpop.permute.xlu0 %846
    %849 = vset.pattern.permute.xlu0 2
    %850 = vperm.xlu0 %849, %v349
    %v851 = vpop.permute.xlu0 %850
    %v853 = vlaneseq
    %v854 = vshrl.u32 %v853, 7
    %v855 = vsub.s32 2, %v854
    %v856 = vrot.slane %v588, %v855
    %v857 = vmul.f32 %v791, %v856
    %v858 = vmul.f32 %v795, %v856
    %v859 = vmul.f32 %v799, %v856
    %v860 = vmul.f32 %v803, %v856
    %v861 = vmul.f32 %v807, %v856
    %v862 = vmul.f32 %v811, %v856
    %v863 = vmul.f32 %v815, %v856
    %v864 = vmul.f32 %v819, %v856
    %v865 = vmul.f32 %v823, %v856
    %v866 = vmul.f32 %v827, %v856
    %v867 = vmul.f32 %v831, %v856
    %v868 = vmul.f32 %v835, %v856
    %v869 = vmul.f32 %v839, %v856
    %v870 = vmul.f32 %v843, %v856
    %v871 = vmul.f32 %v847, %v856
    %v872 = vmul.f32 %v851, %v856
    %v873 = vadd.f32 %v773, %v857
    %v874 = vadd.f32 %v774, %v858
    %v875 = vadd.f32 %v775, %v859
    %v876 = vadd.f32 %v776, %v860
    %v877 = vadd.f32 %v777, %v861
    %v878 = vadd.f32 %v778, %v862
    %v879 = vadd.f32 %v779, %v863
    %v880 = vadd.f32 %v780, %v864
    %v881 = vadd.f32 %v781, %v865
    %v882 = vadd.f32 %v782, %v866
    %v883 = vadd.f32 %v783, %v867
    %v884 = vadd.f32 %v784, %v868
    %v885 = vadd.f32 %v785, %v869
    %v886 = vadd.f32 %v786, %v870
    %v887 = vadd.f32 %v787, %v871
    %v888 = vadd.f32 %v788, %v872
    %v889 = vld [vmem:[%s7] sm:$0xff]
    %v890 = vld [vmem:[%s7 + $0x8] sm:$0xff]
    %v891 = vld [vmem:[%s7 + $0x10] sm:$0xff]
    %v892 = vld [vmem:[%s7 + $0x18] sm:$0xff]
    %vm893 = vcmask 261120
    %v895 = vsel %vm893, %v572, 0
    %v898 = vsel %vm893, %v573, 0
    %v901 = vsel %vm893, %v574, 0
    %v904 = vsel %vm893, %v575, 0
    %v907 = vsel %vm893, %v576, 0
    %v910 = vsel %vm893, %v577, 0
    %v913 = vsel %vm893, %v578, 0
    %v916 = vsel %vm893, %v579, 0
    %v919 = vsel %vm893, %v580, 0
    %v922 = vsel %vm893, %v581, 0
    %v925 = vsel %vm893, %v582, 0
    %v928 = vsel %vm893, %v583, 0
    %v931 = vsel %vm893, %v584, 0
    %v934 = vsel %vm893, %v585, 0
    %v937 = vsel %vm893, %v586, 0
    %v940 = vsel %vm893, %v587, 0
    %942 = vmatprep.subr.mxu0 0.0
    %943 = vmatpush1.msra.mxu0 %v889
    %944 = vmatprep.subr.mxu0 0.0
    %945 = vmatpush1.msra.mxu0 %v890
    %946 = vmatprep.subr.mxu0 0.0
    %947 = vmatpush1.msra.mxu0 %v891
    %948 = vmatprep.subr.mxu0 0.0
    %949 = vmatpush1.msra.mxu0 %v892
    %950 = vmatprep.subr.mxu0 0.0
    %951 = vmatpush1.msra.mxu0 0.0
    %952 = vmatprep.subr.mxu0 0.0
    %953 = vmatpush1.msra.mxu0 0.0
    %954 = vmatprep.subr.mxu0 0.0
    %955 = vmatpush1.msra.mxu0 0.0
    %956 = vmatprep.subr.mxu0 0.0
    %957 = vmatpush1.msra.mxu0 0.0
    %958 = vmatprep.subr.mxu0 0.0
    %959 = vmatpush1.msra.mxu0 0.0
    %960 = vmatprep.subr.mxu0 0.0
    %961 = vmatpush1.msra.mxu0 0.0
    %962 = vmatprep.subr.mxu0 0.0
    %963 = vmatpush1.msra.mxu0 0.0
    %964 = vmatprep.subr.mxu0 0.0
    %965 = vmatpush1.msra.mxu0 0.0
    %966 = vmatprep.subr.mxu0 0.0
    %967 = vmatpush1.msra.mxu0 0.0
    %968 = vmatprep.subr.mxu0 0.0
    %969 = vmatpush1.msra.mxu0 0.0
    %970 = vmatprep.subr.mxu0 0.0
    %971 = vmatpush1.msra.mxu0 0.0
    %972 = vmatprep.subr.mxu0 0.0
    %973 = vmatpush1.msra.mxu0 0.0
    %974 = vmatprep.subr.mxu0 0.0
    %975 = vmatpush1.msra.mxu0 0.0
    %976 = vmatprep.subr.mxu0 0.0
    %977 = vmatpush1.msra.mxu0 0.0
    %978 = vmatprep.subr.mxu0 0.0
    %979 = vmatpush1.msra.mxu0 0.0
    %980 = vmatprep.subr.mxu0 0.0
    %981 = vmatpush1.msra.mxu0 0.0
    %982 = vmatprep.subr.mxu0 0.0
    %983 = vmatpush1.msra.mxu0 0.0
    %984 = vmatprep.subr.mxu0 0.0
    %985 = vmatpush1.msra.mxu0 0.0
    %986 = vmatprep.subr.mxu0 0.0
    %987 = vmatpush1.msra.mxu0 0.0
    %988 = vmatprep.subr.mxu0 0.0
    %989 = vmatpush1.msra.mxu0 0.0
    %990 = vmatprep.subr.mxu0 0.0
    %991 = vmatpush1.msra.mxu0 0.0
    %992 = vmatprep.subr.mxu0 0.0
    %993 = vmatpush1.msra.mxu0 0.0
    %994 = vmatprep.subr.mxu0 0.0
    %995 = vmatpush1.msra.mxu0 0.0
    %996 = vmatprep.subr.mxu0 0.0
    %997 = vmatpush1.msra.mxu0 0.0
    %998 = vmatprep.subr.mxu0 0.0
    %999 = vmatpush1.msra.mxu0 0.0
    %1000 = vmatprep.subr.mxu0 0.0
    %1001 = vmatpush1.msra.mxu0 0.0
    %1002 = vmatprep.subr.mxu0 0.0
    %1003 = vmatpush1.msra.mxu0 0.0
    %1004 = vmatprep.subr.mxu0 0.0
    %1005 = vmatpush1.msra.mxu0 0.0
    %1006 = vmatprep.mubr.f32.mxu0 0.0
    %1007 = vmatmul.mubr.f32.gmra.mrb[0].mxu0 %v895
    %v1008 = vpop.f32.mrb[0].mxu0
    %v1009 = vadd.f32 %v873, %v1008
    %v1010 = vpop.f32.mrb[0].mxu0
    %1011 = vmatprep.mubr.f32.mxu0 0.0
    %1012 = vmatmul.mubr.f32.gmra.mrb[0].mxu0 %v898
    %v1013 = vpop.f32.mrb[0].mxu0
    %v1014 = vadd.f32 %v874, %v1013
    %v1015 = vpop.f32.mrb[0].mxu0
    %1016 = vmatprep.mubr.f32.mxu0 0.0
    %1017 = vmatmul.mubr.f32.gmra.mrb[0].mxu0 %v901
    %v1018 = vpop.f32.mrb[0].mxu0
    %v1019 = vadd.f32 %v875, %v1018
    %v1020 = vpop.f32.mrb[0].mxu0
    %1021 = vmatprep.mubr.f32.mxu0 0.0
    %1022 = vmatmul.mubr.f32.gmra.mrb[0].mxu0 %v904
    %v1023 = vpop.f32.mrb[0].mxu0
    %v1024 = vadd.f32 %v876, %v1023
    %v1025 = vpop.f32.mrb[0].mxu0
    %1026 = vmatprep.mubr.f32.mxu0 0.0
    %1027 = vmatmul.mubr.f32.gmra.mrb[0].mxu0 %v907
    %v1028 = vpop.f32.mrb[0].mxu0
    %v1029 = vadd.f32 %v877, %v1028
    %v1030 = vpop.f32.mrb[0].mxu0
    %1031 = vmatprep.mubr.f32.mxu0 0.0
    %1032 = vmatmul.mubr.f32.gmra.mrb[0].mxu0 %v910
    %v1033 = vpop.f32.mrb[0].mxu0
    %v1034 = vadd.f32 %v878, %v1033
    %v1035 = vpop.f32.mrb[0].mxu0
    %1036 = vmatprep.mubr.f32.mxu0 0.0
    %1037 = vmatmul.mubr.f32.gmra.mrb[0].mxu0 %v913
    %v1038 = vpop.f32.mrb[0].mxu0
    %v1039 = vadd.f32 %v879, %v1038
    %v1040 = vpop.f32.mrb[0].mxu0
    %1041 = vmatprep.mubr.f32.mxu0 0.0
    %1042 = vmatmul.mubr.f32.gmra.mrb[0].mxu0 %v916
    %v1043 = vpop.f32.mrb[0].mxu0
    %v1044 = vadd.f32 %v880, %v1043
    %v1045 = vpop.f32.mrb[0].mxu0
    %1046 = vmatprep.mubr.f32.mxu0 0.0
    %1047 = vmatmul.mubr.f32.gmra.mrb[0].mxu0 %v919
    %v1048 = vpop.f32.mrb[0].mxu0
    %v1049 = vadd.f32 %v881, %v1048
    %v1050 = vpop.f32.mrb[0].mxu0
    %1051 = vmatprep.mubr.f32.mxu0 0.0
    %1052 = vmatmul.mubr.f32.gmra.mrb[0].mxu0 %v922
    %v1053 = vpop.f32.mrb[0].mxu0
    %v1054 = vadd.f32 %v882, %v1053
    %v1055 = vpop.f32.mrb[0].mxu0
    %1056 = vmatprep.mubr.f32.mxu0 0.0
    %1057 = vmatmul.mubr.f32.gmra.mrb[0].mxu0 %v925
    %v1058 = vpop.f32.mrb[0].mxu0
    %v1059 = vadd.f32 %v883, %v1058
    %v1060 = vpop.f32.mrb[0].mxu0
    %1061 = vmatprep.mubr.f32.mxu0 0.0
    %1062 = vmatmul.mubr.f32.gmra.mrb[0].mxu0 %v928
    %v1063 = vpop.f32.mrb[0].mxu0
    %v1064 = vadd.f32 %v884, %v1063
    %v1065 = vpop.f32.mrb[0].mxu0
    %1066 = vmatprep.mubr.f32.mxu0 0.0
    %1067 = vmatmul.mubr.f32.gmra.mrb[0].mxu0 %v931
    %v1068 = vpop.f32.mrb[0].mxu0
    %v1069 = vadd.f32 %v885, %v1068
    %v1070 = vpop.f32.mrb[0].mxu0
    %1071 = vmatprep.mubr.f32.mxu0 0.0
    %1072 = vmatmul.mubr.f32.gmra.mrb[0].mxu0 %v934
    %v1073 = vpop.f32.mrb[0].mxu0
    %v1074 = vadd.f32 %v886, %v1073
    %v1075 = vpop.f32.mrb[0].mxu0
    %1076 = vmatprep.mubr.f32.mxu0 0.0
    %1077 = vmatmul.mubr.f32.gmra.mrb[0].mxu0 %v937
    %v1078 = vpop.f32.mrb[0].mxu0
    %v1079 = vadd.f32 %v887, %v1078
    %v1080 = vpop.f32.mrb[0].mxu0
    %1081 = vmatprep.mubr.f32.mxu0 0.0
    %1082 = vmatmul.mubr.f32.gmra.mrb[0].mxu0 %v940
    %v1083 = vpop.f32.mrb[0].mxu0
    %v1084 = vadd.f32 %v888, %v1083
    %v1085 = vpop.f32.mrb[0].mxu0
    %1086 = vdwg.mxu0
    %v1087 = vld [vmem:[%s9] sm:$0x1]
    %v1089 = vlaneseq
    %v1090 = vshrl.u32 %v1089, 7
    %v1091 = vsub.s32 0, %v1090
    %v1092 = vrot.slane %v1087, %v1091
    %v1094 = vadd.f32 %v1009, %v1092
    %v1095 = vadd.f32 %v1014, %v1092
    %v1096 = vadd.f32 %v1019, %v1092
    %v1097 = vadd.f32 %v1024, %v1092
    %v1098 = vadd.f32 %v1029, %v1092
    %v1099 = vadd.f32 %v1034, %v1092
    %v1100 = vadd.f32 %v1039, %v1092
    %v1101 = vadd.f32 %v1044, %v1092
    %v1102 = vadd.f32 %v1049, %v1092
    %v1103 = vadd.f32 %v1054, %v1092
    %v1104 = vadd.f32 %v1059, %v1092
    %v1105 = vadd.f32 %v1064, %v1092
    %v1106 = vadd.f32 %v1069, %v1092
    %v1107 = vadd.f32 %v1074, %v1092
    %v1108 = vadd.f32 %v1079, %v1092
    %v1109 = vadd.f32 %v1084, %v1092
    %v1110 = vsub.f32 %v172, %v1094
    %v1111 = vsub.f32 %v173, %v1095
    %v1112 = vsub.f32 %v174, %v1096
    %v1113 = vsub.f32 %v175, %v1097
    %v1114 = vsub.f32 %v176, %v1098
    %v1115 = vsub.f32 %v177, %v1099
    %v1116 = vsub.f32 %v178, %v1100
    %v1117 = vsub.f32 %v179, %v1101
    %v1118 = vsub.f32 %v180, %v1102
    %v1119 = vsub.f32 %v181, %v1103
    %v1120 = vsub.f32 %v182, %v1104
    %v1121 = vsub.f32 %v183, %v1105
    %v1122 = vsub.f32 %v184, %v1106
    %v1123 = vsub.f32 %v185, %v1107
    %v1124 = vsub.f32 %v186, %v1108
    %v1125 = vsub.f32 %v187, %v1109
    %v1126 = vmul.f32 %v1110, %v257
    %v1127 = vmul.f32 %v1111, %v262
    %v1128 = vmul.f32 %v1112, %v267
    %v1129 = vmul.f32 %v1113, %v272
    %v1130 = vmul.f32 %v1114, %v277
    %v1131 = vmul.f32 %v1115, %v282
    %v1132 = vmul.f32 %v1116, %v287
    %v1133 = vmul.f32 %v1117, %v292
    %v1134 = vmul.f32 %v1118, %v297
    %v1135 = vmul.f32 %v1119, %v302
    %v1136 = vmul.f32 %v1120, %v307
    %v1137 = vmul.f32 %v1121, %v312
    %v1138 = vmul.f32 %v1122, %v317
    %v1139 = vmul.f32 %v1123, %v322
    %v1140 = vmul.f32 %v1124, %v327
    %v1141 = vmul.f32 %v1125, %v332
    %v1142 = vld [vmem:[#allocation2] sm:$0x1]
    %v1143 = vmul.f32 %v1126, %v1126
    %v1144 = vmul.f32 %v1127, %v1127
    %v1145 = vmul.f32 %v1128, %v1128
    %v1146 = vmul.f32 %v1129, %v1129
    %v1147 = vmul.f32 %v1130, %v1130
    %v1148 = vmul.f32 %v1131, %v1131
    %v1149 = vmul.f32 %v1132, %v1132
    %v1150 = vmul.f32 %v1133, %v1133
    %v1151 = vmul.f32 %v1134, %v1134
    %v1152 = vmul.f32 %v1135, %v1135
    %v1153 = vmul.f32 %v1136, %v1136
    %v1154 = vmul.f32 %v1137, %v1137
    %v1155 = vmul.f32 %v1138, %v1138
    %v1156 = vmul.f32 %v1139, %v1139
    %v1157 = vmul.f32 %v1140, %v1140
    %v1158 = vmul.f32 %v1141, %v1141
    %vm1159 = vcmask 23552
    %v1160 = vsel %vm1159, %v1143, 0.0
    %v1161 = vsel %vm1159, %v1144, 0.0
    %v1162 = vadd.f32 %v1160, %v1161
    %v1163 = vsel %vm1159, %v1145, 0.0
    %v1164 = vadd.f32 %v1162, %v1163
    %v1165 = vsel %vm1159, %v1146, 0.0
    %v1166 = vadd.f32 %v1164, %v1165
    %v1167 = vsel %vm1159, %v1147, 0.0
    %v1168 = vadd.f32 %v1166, %v1167
    %v1169 = vsel %vm1159, %v1148, 0.0
    %v1170 = vadd.f32 %v1168, %v1169
    %v1171 = vsel %vm1159, %v1149, 0.0
    %v1172 = vadd.f32 %v1170, %v1171
    %v1173 = vsel %vm1159, %v1150, 0.0
    %v1174 = vadd.f32 %v1172, %v1173
    %v1175 = vsel %vm1159, %v1151, 0.0
    %v1176 = vadd.f32 %v1174, %v1175
    %v1177 = vsel %vm1159, %v1152, 0.0
    %v1178 = vadd.f32 %v1176, %v1177
    %v1179 = vsel %vm1159, %v1153, 0.0
    %v1180 = vadd.f32 %v1178, %v1179
    %v1181 = vsel %vm1159, %v1154, 0.0
    %v1182 = vadd.f32 %v1180, %v1181
    %v1183 = vsel %vm1159, %v1155, 0.0
    %v1184 = vadd.f32 %v1182, %v1183
    %v1185 = vsel %vm1159, %v1156, 0.0
    %v1186 = vadd.f32 %v1184, %v1185
    %v1187 = vsel %vm1159, %v1157, 0.0
    %v1188 = vadd.f32 %v1186, %v1187
    %v1189 = vsel %vm1159, %v1158, 0.0
    %v1190 = vadd.f32 %v1188, %v1189
    %1191 = vadd.xlane.f32.xlu0 %v1190
    %v1192 = vpop.xlane.xlu0 %1191
    %v1193 = vrot.slane %v1192, 4
    %v1194 = vadd.f32 %v1192, %v1193
    %v1195 = vrot.slane %v1194, 2
    %v1196 = vadd.f32 %v1194, %v1195
    %v1197 = vrot.slane %v1196, 1
    %v1198 = vadd.f32 %v1196, %v1197
    %s1199 = vtos %v1198
    %v1200 = vstv %s1199
    %v1201 = vadd.f32 %v1142, %v1200
    %vm1202 = vcmask 0
    %1203 = vst.msk [vmem:[#allocation2] sm:$0x1] %vm1202, %v1201
    // Predicated region
    $region50: #{forward.1} parent=1 // pred_check
      %p1204 = pneg %p49
    $region51: #{forward.1} parent=1 // pred_check_branch
      %1206 = sbr.rel (%p1204) target = $region53
    $region52: #{forward.1} parent=1 // pred_region
      %v1207 = vld [vmem:[#allocation2] sm:$0x1]
      %1208 = vst.msk [vmem:[#allocation6] sm:$0x1] %vm1202, %v1207
    $region53: #{forward.1} parent=1 // pred_fallthru
      _
    // Predicated region
    $region54: #{forward.1} parent=1 // pred_check
      _
    $region55: #{forward.1} parent=1 // pred_check_branch
      %1210 = sbr.rel (0) target = $region57
    $region56: #{forward.1} parent=1 // pred_region
      %s1212 = ssub.s32 16, 16
      %1213 = vsyncadd [#allocation4], %s1212
      %s1215 = sshll.u32 [#allocation6], 4
      %s1216 = int_to_ptr.vmem [resolvable:$true] %s1215
      %1218 = dma.vmem_to_hbm [thread:$0]  %s1216, 16, %s10, [#allocation4]
    $region57: #{forward.1} parent=1 // pred_fallthru
      _
    // Predicated region
    $region58: #{forward.1} parent=1 // pred_check
      _
    $region59: #{forward.1} parent=1 // pred_check_branch
      %1220 = sbr.rel (0) target = $region61
    $region60: #{forward.1} parent=1 // pred_region
      %1221 = dma.done [#allocation4], 16
    $region61: #{forward.1} parent=1 // pred_fallthru
      _
    %1222 = vsyncpa [#allocation4], 1
    %1223 = vsyncpa [#allocation5], 1

</llo_original>
